<compile_context>
chip_gen: v7x
topology: tpu7x:2x2x1
jax: 0.10.0
libtpu: 0.0.40
codegen_flags: <defaults>
</compile_context>

<pallas_src>
import functools

import jax
import jax.numpy as jnp
from jax.experimental import pallas as pl
from jax.experimental.pallas import tpu as pltpu


def _sigmoid(x):
    # Explicit formula (exp -> EUP slot). Used by both the kernels and the reference so
    # the only numerical difference between them is the bf16 matmul.
    return 1.0 / (1.0 + jnp.exp(-x))


# ---------------------------------------------------------------------------
# Phase 1: parallel gate kernel (non-recurrent work, hoisted off the scan path)
# ---------------------------------------------------------------------------
def _qrnn_gate_kernel(x_ref, w_ref, b_ref, fz_ref, fm1_ref, o_ref):
    """One row-block of the flattened sequence.

    x_ref:   (R_BLK, I)   rows of X reshaped to (S*B, I)
    w_ref:   (3, I, H)    gate-major weights (z, f, o), bf16
    b_ref:   (3, 1, H)    gate-major bias, f32
    fz_ref:  (R_BLK, H)   f * z
    fm1_ref: (R_BLK, H)   1 - f
    o_ref:   (R_BLK, H)   sigmoid(O)
    """
    x = x_ref[...].astype(jnp.bfloat16)  # bf16 MXU operands, f32 accumulation
    y_z = jnp.dot(x, w_ref[0], preferred_element_type=jnp.float32) + b_ref[0]
    y_f = jnp.dot(x, w_ref[1], preferred_element_type=jnp.float32) + b_ref[1]
    y_o = jnp.dot(x, w_ref[2], preferred_element_type=jnp.float32) + b_ref[2]

    z = jnp.tanh(y_z)          # gate math stays in f32 (also required on v5e)
    f = _sigmoid(y_f)
    fz_ref[...] = f * z
    fm1_ref[...] = 1.0 - f
    o_ref[...] = _sigmoid(y_o)


# ---------------------------------------------------------------------------
# Phase 2: sequential ForgetMult scan (time-blocked)
# ---------------------------------------------------------------------------
def _qrnn_scan_kernel(fz_ref, fm1_ref, o_ref, h_ref, c_last_ref, c_scr, *, t_blk):
    """One time block of the recurrence. Grid axis 0 = time blocks (sequential).

    fz_ref/fm1_ref/o_ref: (T_BLK, B, H) precomputed gate terms
    h_ref:                (T_BLK, B, H) output H_t = o_t * c_t
    c_last_ref:           (1, B, H)     final cell state (written on last step only)
    c_scr:                (B, H)        carried cell state, persists across grid steps
    """
    tb = pl.program_id(0)

    @pl.when(tb == 0)
    def _():
        # hidden_init is None in the reference module -> c_{-1} = 0, which makes
        # c_0 = fz_0 + fm1_0 * 0 = f_0 * z_0 without any per-step special case.
        c_scr[...] = jnp.zeros_like(c_scr)

    def step(t, c):
        c = fz_ref[t] + fm1_ref[t] * c  # ForgetMult: c_t = f_t z_t + (1 - f_t) c_{t-1}
        h_ref[t] = o_ref[t] * c         # output gate (off the serial carry chain)
        return c

    c_final = jax.lax.fori_loop(0, t_blk, step, c_scr[...], unroll=True)
    c_scr[...] = c_final

    @pl.when(tb == pl.num_programs(0) - 1)
    def _():
        c_last_ref[0] = c_final         # C[-1] written once, on the final grid step


# ---------------------------------------------------------------------------
# Wrappers
# ---------------------------------------------------------------------------
def _largest_divisor_leq(n, limit):
    for d in range(min(n, limit), 0, -1):
        if n % d == 0:
            return d
    return n


def _pick_row_block(m, limit=512):
    # Prefer a multiple of 8 (sublane tile); fall back to the whole array (always legal).
    for d in range(min(m, limit), 0, -1):
        if m % d == 0 and d % 8 == 0:
            return d
    return m


def qrnn_layer(x, w, b, hidden_size, *, t_blk=None, r_blk=None):
    """One QRNNLayer forward (output_gate=True, zoneout=0, hidden=None).

    x: (S, B, I) f32;  w: (3, I, H) f32;  b: (3, 1, H) f32.
    Returns (H: (S, B, H) f32, C_last: (1, B, H) f32).
    """
    S, B, I = x.shape
    H = hidden_size
    assert w.shape == (3, I, H) and b.shape == (3, 1, H)
    M = S * B

    # Block sizing. At production sizes: make r_blk a multiple of the MXU M tile
    # (256 on v6e/v7x, 128 on v5e), pick H a multiple of 128 so stores are lane-dense,
    # and size t_blk so the gate blocks fit scoped VMEM (roughly half the v6e t_blk on
    # v7x, which has 64 MiB VMEM per TensorCore).
    if r_blk is None:
        r_blk = _pick_row_block(M, 512)
    if t_blk is None:
        t_blk = _largest_divisor_leq(S, 128)
    assert M % r_blk == 0 and S % t_blk == 0

    x2 = x.reshape(M, I)              # flatten (S, B) -> rows: big-M matmul, 2-D kernel
    w_bf16 = w.astype(jnp.bfloat16)   # native MXU dtype; halves weight VMEM footprint

    # --- Phase 1: batched gates (fully parallel over row blocks) -------------------
    # NOTE(perf): at production sizes mark the w/b specs single-buffered
    # (pipeline_mode=pl.Buffered(1)) since their index_map is constant, so the
    # pipeliner does not hold two copies of the (3, I, H) weight in VMEM.
    fz2, fm12, o2 = pl.pallas_call(
        _qrnn_gate_kernel,
        out_shape=(
            jax.ShapeDtypeStruct((M, H), jnp.float32),
            jax.ShapeDtypeStruct((M, H), jnp.float32),
            jax.ShapeDtypeStruct((M, H), jnp.float32),
        ),
        grid=(M // r_blk,),
        in_specs=[
            pl.BlockSpec((r_blk, I), lambda r: (r, 0)),
            pl.BlockSpec((3, I, H), lambda r: (0, 0, 0)),
            pl.BlockSpec((3, 1, H), lambda r: (0, 0, 0)),
        ],
        out_specs=[
            pl.BlockSpec((r_blk, H), lambda r: (r, 0)),
            pl.BlockSpec((r_blk, H), lambda r: (r, 0)),
            pl.BlockSpec((r_blk, H), lambda r: (r, 0)),
        ],
        compiler_params=pltpu.CompilerParams(
            dimension_semantics=("parallel",),
        ),
    )(x2, w_bf16, b)

    fz = fz2.reshape(S, B, H)
    fm1 = fm12.reshape(S, B, H)
    o = o2.reshape(S, B, H)

    # --- Phase 2: sequential ForgetMult scan, time-blocked --------------------------
    # NOTE(perf): on v7x a leading batch-block grid axis marked "parallel" would let the
    # second TensorCore run an independent batch shard of this scan (pointless at B=4).
    scan_kernel = functools.partial(_qrnn_scan_kernel, t_blk=t_blk)
    h, c_last = pl.pallas_call(
        scan_kernel,
        out_shape=(
            jax.ShapeDtypeStruct((S, B, H), jnp.float32),
            jax.ShapeDtypeStruct((1, B, H), jnp.float32),
        ),
        grid=(S // t_blk,),
        in_specs=[
            pl.BlockSpec((t_blk, B, H), lambda tb: (tb, 0, 0)),
            pl.BlockSpec((t_blk, B, H), lambda tb: (tb, 0, 0)),
            pl.BlockSpec((t_blk, B, H), lambda tb: (tb, 0, 0)),
        ],
        out_specs=[
            pl.BlockSpec((t_blk, B, H), lambda tb: (tb, 0, 0)),
            pl.BlockSpec((1, B, H), lambda tb: (0, 0, 0)),
        ],
        scratch_shapes=[pltpu.VMEM((B, H), jnp.float32)],
        compiler_params=pltpu.CompilerParams(
            dimension_semantics=("arbitrary",),   # recurrence over time -> sequential
        ),
    )(fz, fm1, o)
    return h, c_last


def qrnn_forward(x, params, hidden_size, *, t_blk=None, r_blk=None):
    """QRNN.forward with hidden=None and dropout=0 (module defaults)."""
    next_hidden = []
    for (w, b) in params:
        x, hn = qrnn_layer(x, w, b, hidden_size, t_blk=t_blk, r_blk=r_blk)
        next_hidden.append(hn)
    return x, jnp.concatenate(next_hidden, axis=0)   # (num_layers, B, H)


def init_qrnn_params(key, input_size, hidden_size, num_layers):
    """nn.Linear-style init (uniform +-1/sqrt(fan_in)), stored gate-major (3, I, H)."""
    params = []
    for layer in range(num_layers):
        in_feat = input_size if layer == 0 else hidden_size
        key, k_w, k_b = jax.random.split(key, 3)
        bound = 1.0 / (in_feat ** 0.5)
        w_lin = jax.random.uniform(k_w, (3 * hidden_size, in_feat), jnp.float32,
                                   minval=-bound, maxval=bound)
        b_lin = jax.random.uniform(k_b, (3 * hidden_size,), jnp.float32,
                                   minval=-bound, maxval=bound)
        w = jnp.transpose(w_lin.reshape(3, hidden_size, in_feat), (0, 2, 1))  # (3, I, H)
        b = b_lin.reshape(3, 1, hidden_size)                                  # (3, 1, H)
        params.append((w, b))
    return params


def qrnn_reference(x, params, hidden_size, matmul_dtype=jnp.float32):
    """Pure-JAX mirror of the PyTorch forward (hidden=None, dropout=0).

    matmul_dtype=jnp.bfloat16 mirrors the kernel's bf16 MXU matmul (f32 accumulation).
    Output gate: sigmoid applied exactly once, as in torch.sigmoid(O) * C.
    """
    next_hidden = []
    for (w, b) in params:
        y = jnp.einsum("sbi,gih->gsbh",
                       x.astype(matmul_dtype), w.astype(matmul_dtype),
                       preferred_element_type=jnp.float32) + b[:, None]  # (3, S, B, H)
        z = jnp.tanh(y[0])
        f = _sigmoid(y[1])
        o = _sigmoid(y[2])

        def step(c_prev, zf):
            z_t, f_t = zf
            c_t = f_t * z_t + (1.0 - f_t) * c_prev
            return c_t, c_t

        c0 = f[0] * z[0]
        _, c_rest = jax.lax.scan(step, c0, (z[1:], f[1:]))
        c = jnp.concatenate([c0[None], c_rest], axis=0)
        x = o * c
        next_hidden.append(c[-1:])
    return x, jnp.concatenate(next_hidden, axis=0)


if __name__ == "__main__":
    seq_len, batch = 8, 4
    input_size, hidden_size, num_layers = 16, 32, 2

    key = jax.random.PRNGKey(0)
    k_x, k_p = jax.random.split(key)
    x = jax.random.normal(k_x, (seq_len, batch, input_size), jnp.float32)
    params = init_qrnn_params(k_p, input_size, hidden_size, num_layers)

    # t_blk=4 / r_blk=16 so both grids take >1 step (exercises the cross-block c carry).
    out, next_hidden = qrnn_forward(x, params, hidden_size, t_blk=4, r_blk=16)
    out = jax.block_until_ready(out)
    next_hidden = jax.block_until_ready(next_hidden)

    assert out.shape == (seq_len, batch, hidden_size)
    assert next_hidden.shape == (num_layers, batch, hidden_size)

    # Tight check against a reference that mirrors the kernel's bf16 matmul.
    ref_out, ref_hid = qrnn_reference(x, params, hidden_size, matmul_dtype=jnp.bfloat16)
    assert jnp.allclose(out, ref_out, atol=1e-3, rtol=1e-3)
    assert jnp.allclose(next_hidden, ref_hid, atol=1e-3, rtol=1e-3)

    # Coarse sanity check against the full-f32 reference (only bf16 rounding differs).
    ref_out32, ref_hid32 = qrnn_reference(x, params, hidden_size, matmul_dtype=jnp.float32)
    assert jnp.allclose(out, ref_out32, atol=5e-2, rtol=5e-2)
    assert jnp.allclose(next_hidden, ref_hid32, atol=5e-2, rtol=5e-2)

    print("KERNEL_OK")
</pallas_src>

<mosaic_0001>
module attributes {stable_mosaic.version = 11 : i64} {
  func.func @_qrnn_gate_kernel(%arg0: i32, %arg1: memref<16x16xf32, #tpu.memory_space<vmem>>, %arg2: memref<3x16x32xbf16, #tpu.memory_space<vmem>>, %arg3: memref<3x1x32xf32, #tpu.memory_space<vmem>>, %arg4: memref<16x32xf32, #tpu.memory_space<vmem>>, %arg5: memref<16x32xf32, #tpu.memory_space<vmem>>, %arg6: memref<16x32xf32, #tpu.memory_space<vmem>>) attributes {dimension_semantics = [#tpu.dimension_semantics<parallel>], iteration_bounds = array<i64: 2>, scalar_prefetch = 0 : i64, scratch_operands = 0 : i64, tpu.core_type = #tpu.core_type<tc>, window_params = [{transform_indices = @transform_0, window_bounds = array<i64: 16, 16>}, {pipeline_mode = #tpu.pipeline_mode<synchronous>, transform_indices = @transform_1, window_bounds = array<i64: 3, 16, 32>}, {pipeline_mode = #tpu.pipeline_mode<synchronous>, transform_indices = @transform_2, window_bounds = array<i64: 3, 1, 32>}, {transform_indices = @transform_3, window_bounds = array<i64: 16, 32>}, {transform_indices = @transform_4, window_bounds = array<i64: 16, 32>}, {transform_indices = @transform_5, window_bounds = array<i64: 16, 32>}]} {
    %c0 = arith.constant 0 : index
    %c0_0 = arith.constant 0 : index
    %0 = vector.load %arg1[%c0, %c0_0] : memref<16x16xf32, #tpu.memory_space<vmem>>, vector<16x16xf32>
    %1 = arith.truncf %0 : vector<16x16xf32> to vector<16x16xbf16>
    %c0_1 = arith.constant 0 : index
    %c0_2 = arith.constant 0 : index
    %c0_3 = arith.constant 0 : index
    %2 = vector.load %arg2[%c0_1, %c0_2, %c0_3] : memref<3x16x32xbf16, #tpu.memory_space<vmem>>, vector<1x16x32xbf16>
    %3 = vector.shape_cast %2 : vector<1x16x32xbf16> to vector<16x32xbf16>
    %cst = arith.constant dense<0.000000e+00> : vector<16x32xf32>
    %4 = tpu.matmul %1, %3, %cst {dimension_numbers = #tpu.dot_dimension_numbers<[1], [0], [0], [1], [0, 0, 1, 1], [], []>} : vector<16x16xbf16>, vector<16x32xbf16>, vector<16x32xf32> -> vector<16x32xf32>
    %c0_4 = arith.constant 0 : index
    %c0_5 = arith.constant 0 : index
    %c0_6 = arith.constant 0 : index
    %5 = vector.load %arg3[%c0_4, %c0_5, %c0_6] : memref<3x1x32xf32, #tpu.memory_space<vmem>>, vector<1x1x32xf32>
    %6 = vector.shape_cast %5 : vector<1x1x32xf32> to vector<1x32xf32>
    %7 = vector.broadcast %6 : vector<1x32xf32> to vector<16x32xf32>
    %8 = arith.addf %4, %7 : vector<16x32xf32>
    %c1 = arith.constant 1 : index
    %c0_7 = arith.constant 0 : index
    %c0_8 = arith.constant 0 : index
    %9 = vector.load %arg2[%c1, %c0_7, %c0_8] : memref<3x16x32xbf16, #tpu.memory_space<vmem>>, vector<1x16x32xbf16>
    %10 = vector.shape_cast %9 : vector<1x16x32xbf16> to vector<16x32xbf16>
    %cst_9 = arith.constant dense<0.000000e+00> : vector<16x32xf32>
    %11 = tpu.matmul %1, %10, %cst_9 {dimension_numbers = #tpu.dot_dimension_numbers<[1], [0], [0], [1], [0, 0, 1, 1], [], []>} : vector<16x16xbf16>, vector<16x32xbf16>, vector<16x32xf32> -> vector<16x32xf32>
    %c1_10 = arith.constant 1 : index
    %c0_11 = arith.constant 0 : index
    %c0_12 = arith.constant 0 : index
    %12 = vector.load %arg3[%c1_10, %c0_11, %c0_12] : memref<3x1x32xf32, #tpu.memory_space<vmem>>, vector<1x1x32xf32>
    %13 = vector.shape_cast %12 : vector<1x1x32xf32> to vector<1x32xf32>
    %14 = vector.broadcast %13 : vector<1x32xf32> to vector<16x32xf32>
    %15 = arith.addf %11, %14 : vector<16x32xf32>
    %c2 = arith.constant 2 : index
    %c0_13 = arith.constant 0 : index
    %c0_14 = arith.constant 0 : index
    %16 = vector.load %arg2[%c2, %c0_13, %c0_14] : memref<3x16x32xbf16, #tpu.memory_space<vmem>>, vector<1x16x32xbf16>
    %17 = vector.shape_cast %16 : vector<1x16x32xbf16> to vector<16x32xbf16>
    %cst_15 = arith.constant dense<0.000000e+00> : vector<16x32xf32>
    %18 = tpu.matmul %1, %17, %cst_15 {dimension_numbers = #tpu.dot_dimension_numbers<[1], [0], [0], [1], [0, 0, 1, 1], [], []>} : vector<16x16xbf16>, vector<16x32xbf16>, vector<16x32xf32> -> vector<16x32xf32>
    %c2_16 = arith.constant 2 : index
    %c0_17 = arith.constant 0 : index
    %c0_18 = arith.constant 0 : index
    %19 = vector.load %arg3[%c2_16, %c0_17, %c0_18] : memref<3x1x32xf32, #tpu.memory_space<vmem>>, vector<1x1x32xf32>
    %20 = vector.shape_cast %19 : vector<1x1x32xf32> to vector<1x32xf32>
    %21 = vector.broadcast %20 : vector<1x32xf32> to vector<16x32xf32>
    %22 = arith.addf %18, %21 : vector<16x32xf32>
    %23 = math.tanh %8 : vector<16x32xf32>
    %cst_19 = arith.constant 0.000000e+00 : f32
    %24 = vector.broadcast %cst_19 : f32 to vector<16x32xf32>
    %25 = arith.subf %24, %15 : vector<16x32xf32>
    %26 = math.exp %25 : vector<16x32xf32>
    %cst_20 = arith.constant 1.000000e+00 : f32
    %27 = vector.broadcast %cst_20 : f32 to vector<16x32xf32>
    %28 = arith.addf %27, %26 : vector<16x32xf32>
    %cst_21 = arith.constant 1.000000e+00 : f32
    %29 = vector.broadcast %cst_21 : f32 to vector<16x32xf32>
    %30 = arith.divf %29, %28 : vector<16x32xf32>
    %31 = arith.mulf %30, %23 : vector<16x32xf32>
    %c0_22 = arith.constant 0 : index
    %c0_23 = arith.constant 0 : index
    %32 = vector.load %arg4[%c0_22, %c0_23] : memref<16x32xf32, #tpu.memory_space<vmem>>, vector<16x32xf32>
    tpu.vector_store %arg4[%c0_22, %c0_23], %31 {strides = array<i32>} : memref<16x32xf32, #tpu.memory_space<vmem>>, vector<16x32xf32>,
    %cst_24 = arith.constant 1.000000e+00 : f32
    %33 = vector.broadcast %cst_24 : f32 to vector<16x32xf32>
    %34 = arith.subf %33, %30 : vector<16x32xf32>
    %c0_25 = arith.constant 0 : index
    %c0_26 = arith.constant 0 : index
    %35 = vector.load %arg5[%c0_25, %c0_26] : memref<16x32xf32, #tpu.memory_space<vmem>>, vector<16x32xf32>
    tpu.vector_store %arg5[%c0_25, %c0_26], %34 {strides = array<i32>} : memref<16x32xf32, #tpu.memory_space<vmem>>, vector<16x32xf32>,
    %cst_27 = arith.constant 0.000000e+00 : f32
    %36 = vector.broadcast %cst_27 : f32 to vector<16x32xf32>
    %37 = arith.subf %36, %22 : vector<16x32xf32>
    %38 = math.exp %37 : vector<16x32xf32>
    %cst_28 = arith.constant 1.000000e+00 : f32
    %39 = vector.broadcast %cst_28 : f32 to vector<16x32xf32>
    %40 = arith.addf %39, %38 : vector<16x32xf32>
    %cst_29 = arith.constant 1.000000e+00 : f32
    %41 = vector.broadcast %cst_29 : f32 to vector<16x32xf32>
    %42 = arith.divf %41, %40 : vector<16x32xf32>
    %c0_30 = arith.constant 0 : index
    %c0_31 = arith.constant 0 : index
    %43 = vector.load %arg6[%c0_30, %c0_31] : memref<16x32xf32, #tpu.memory_space<vmem>>, vector<16x32xf32>
    tpu.vector_store %arg6[%c0_30, %c0_31], %42 {strides = array<i32>} : memref<16x32xf32, #tpu.memory_space<vmem>>, vector<16x32xf32>,
    return
  }
  func.func @transform_0(%arg0: i32) -> (i32, i32) {
    %c0_i32 = arith.constant 0 : i32
    %c0_i32_0 = arith.constant 0 : i32
    return %arg0, %c0_i32 : i32, i32
  }
  func.func @transform_1(%arg0: i32) -> (i32, i32, i32) {
    %c0_i32 = arith.constant 0 : i32
    %c0_i32_0 = arith.constant 0 : i32
    %c0_i32_1 = arith.constant 0 : i32
    %c0_i32_2 = arith.constant 0 : i32
    return %c0_i32, %c0_i32_0, %c0_i32_1 : i32, i32, i32
  }
  func.func @transform_2(%arg0: i32) -> (i32, i32, i32) {
    %c0_i32 = arith.constant 0 : i32
    %c0_i32_0 = arith.constant 0 : i32
    %c0_i32_1 = arith.constant 0 : i32
    %c0_i32_2 = arith.constant 0 : i32
    return %c0_i32, %c0_i32_0, %c0_i32_1 : i32, i32, i32
  }
  func.func @transform_3(%arg0: i32) -> (i32, i32) {
    %c0_i32 = arith.constant 0 : i32
    %c0_i32_0 = arith.constant 0 : i32
    return %arg0, %c0_i32 : i32, i32
  }
  func.func @transform_4(%arg0: i32) -> (i32, i32) {
    %c0_i32 = arith.constant 0 : i32
    %c0_i32_0 = arith.constant 0 : i32
    return %arg0, %c0_i32 : i32, i32
  }
  func.func @transform_5(%arg0: i32) -> (i32, i32) {
    %c0_i32 = arith.constant 0 : i32
    %c0_i32_0 = arith.constant 0 : i32
    return %arg0, %c0_i32 : i32, i32
  }
}

</mosaic_0001>

<llo_original>
// kernel: tpu_custom_call.1
$region0: #{tpu_custom_call.1}
  #allocation0 [shape = 'u32[]', space=smem, size = 0x4, offset = 0x4, fixed_abs, tag = 'smem constant byte address 0x4 - core index']
  #allocation1 [shape = 'u32[144,128]{1,0:T(1,128)}', space=vmem, size = 0x12000, scoped, tag = 'internal scratch']
  %s0 = inlined_call_operand.vmem [shape: f32[32,16], index: 0, kind: input, shape index: {}]
  %s1 = inlined_call_operand.vmem [shape: bf16[3,16,32], index: 1, kind: input, shape index: {}]
  %s2 = inlined_call_operand.vmem [shape: f32[3,1,32], index: 2, kind: input, shape index: {}]
  %s3 = inlined_call_operand.hbm [shape: f32[32,32], index: 3, kind: output, shape index: {0}]
  %s4 = inlined_call_operand.hbm [shape: f32[32,32], index: 4, kind: output, shape index: {1}]
  %s5 = inlined_call_operand.hbm [shape: f32[32,32], index: 5, kind: output, shape index: {2}]
  %6 = xla_tuple %s3, %s4, %s5
  %s7 = sld [smem:[#allocation0]]
  $region61: #{tpu_custom_call.1} parent=0
    _
  %s9 = ssub.s32 1, %s7
  %s10 = scalar_select 0, %s9, %s7
  $region1: #{tpu_custom_call.1} parent=0
    #allocation2 [shape = 'u8[16384]{0}', space=vmem, size = 0x4000, scoped, tag = 'output window, operand 0']
    #allocation3 [shape = 's32[2]{0}', space=sflag, size = 0x8, scoped, tag = 'scoped memory for tpu_custom_call.1']
    #allocation4 [shape = 'u8[16384]{0}', space=vmem, size = 0x4000, scoped, tag = 'output window, operand 1']
    #allocation5 [shape = 's32[2]{0}', space=sflag, size = 0x8, scoped, tag = 'scoped memory for tpu_custom_call.1']
    #allocation6 [shape = 'u8[16384]{0}', space=vmem, size = 0x4000, scoped, tag = 'output window, operand 2']
    %11 = vsyncpa [#allocation3], 0
    %s12 = scalar_lea.sflag [#allocation3], 1
    %13 = vsyncpa %s12, 0
    %14 = vsyncpa [#allocation5], 0
    %s15 = scalar_lea.sflag [#allocation5], 1
    %16 = vsyncpa %s15, 0
    loop: start=0, step=1, limit=4
    $region2: #{tpu_custom_call.1} parent=1 // loop_pre_header
      _
    $region3: #{tpu_custom_call.1} parent=1 // loop_header
      %s18 = sphi 0, %s22
      %p19 = scmp.ge.s32.totalorder %s18, 4
      %s28 = sphi 0, %s30
      %s31 = sphi 0, %s28
      %s32 = sphi 0, %s31
      %s48 = sphi 0, %s32
      %s52 = sphi 0, %s52
      %s54 = sphi 0, %s52
      %s55 = sphi 0, %s54
      %s69 = sphi 0, %s55
      %s73 = sphi 0, %s73
      %s75 = sphi 0, %s73
      %s76 = sphi 0, %s75
      %s90 = sphi 0, %s76
      %s96 = sphi 0, %s98
      %s99 = sphi 0, %s96
      %s100 = sphi 0, %s99
      %s116 = sphi 0, %s100
      %s122 = sphi 0, %s124
      %s125 = sphi 0, %s122
      %s126 = sphi 0, %s125
      %s142 = sphi 0, %s126
      %s148 = sphi 0, %s150
      %s151 = sphi 0, %s148
      %s152 = sphi 0, %s151
      %s168 = sphi 0, %s152
    $region4: #{tpu_custom_call.1} parent=1 // loop_header_branch
      %21 = sbr.rel (%p19) target = $region8
    $region5: #{tpu_custom_call.1} parent=1 // loop_body
      %s23 = ssub.s32 %s18, 1
      %s24 = ssub.s32 %s18, 2
      %s25 = sadd.s32 %s18, 1
      %s26 = ssub.s32 %s18, %s25
      %p27 = scmp.eq.s32.totalorder %s26, 0
      %s29 = sadd.s32 %s28, 1
      %s30 = scalar_select %p27, %s28, %s29
      %p33 = pneg %p27
      %p34 = scmp.eq.s32.totalorder %s18, 1
      %p35 = por %p33, %p34
      %p36 = scmp.ne.s32.totalorder %s28, %s31
      %p37 = scmp.eq.s32.totalorder %s18, 0
      %p38 = por %p36, %p37
      %p39 = scmp.ne.s32.totalorder %s28, %s31
      %p40 = scmp.eq.s32.totalorder %s23, 1
      %p41 = por %p39, %p40
      %p42 = scmp.ne.s32.totalorder %s31, %s32
      %p43 = scmp.eq.s32.totalorder %s23, 0
      %p44 = por %p42, %p43
      %p45 = scmp.ne.s32.totalorder %s31, %s32
      %p46 = scmp.eq.s32.totalorder %s24, 1
      %p47 = por %p45, %p46
      %p49 = scmp.ne.s32.totalorder %s32, %s48
      %p50 = scmp.eq.s32.totalorder %s24, 0
      %p51 = por %p49, %p50
      %s53 = sadd.s32 %s52, 1
      %p56 = scmp.eq.s32.totalorder %s18, 1
      %p57 = scmp.ne.s32.totalorder %s52, %s54
      %p58 = scmp.eq.s32.totalorder %s18, 0
      %p59 = por %p57, %p58
      %p60 = scmp.ne.s32.totalorder %s52, %s54
      %p61 = scmp.eq.s32.totalorder %s23, 1
      %p62 = por %p60, %p61
      %p63 = scmp.ne.s32.totalorder %s54, %s55
      %p64 = scmp.eq.s32.totalorder %s23, 0
      %p65 = por %p63, %p64
      %p66 = scmp.ne.s32.totalorder %s54, %s55
      %p67 = scmp.eq.s32.totalorder %s24, 1
      %p68 = por %p66, %p67
      %p70 = scmp.ne.s32.totalorder %s55, %s69
      %p71 = scmp.eq.s32.totalorder %s24, 0
      %p72 = por %p70, %p71
      %s74 = sadd.s32 %s73, 1
      %p77 = scmp.eq.s32.totalorder %s18, 1
      %p78 = scmp.ne.s32.totalorder %s73, %s75
      %p79 = scmp.eq.s32.totalorder %s18, 0
      %p80 = por %p78, %p79
      %p81 = scmp.ne.s32.totalorder %s73, %s75
      %p82 = scmp.eq.s32.totalorder %s23, 1
      %p83 = por %p81, %p82
      %p84 = scmp.ne.s32.totalorder %s75, %s76
      %p85 = scmp.eq.s32.totalorder %s23, 0
      %p86 = por %p84, %p85
      %p87 = scmp.ne.s32.totalorder %s75, %s76
      %p88 = scmp.eq.s32.totalorder %s24, 1
      %p89 = por %p87, %p88
      %p91 = scmp.ne.s32.totalorder %s76, %s90
      %p92 = scmp.eq.s32.totalorder %s24, 0
      %p93 = por %p91, %p92
      %s94 = ssub.s32 %s18, %s25
      %p95 = scmp.eq.s32.totalorder %s94, 0
      %s97 = sadd.s32 %s96, 1
      %s98 = scalar_select %p95, %s96, %s97
      %p101 = pneg %p95
      %p102 = scmp.eq.s32.totalorder %s18, 1
      %p103 = por %p101, %p102
      %p104 = scmp.ne.s32.totalorder %s96, %s99
      %p105 = scmp.eq.s32.totalorder %s18, 0
      %p106 = por %p104, %p105
      %p107 = scmp.ne.s32.totalorder %s96, %s99
      %p108 = scmp.eq.s32.totalorder %s23, 1
      %p109 = por %p107, %p108
      %p110 = scmp.ne.s32.totalorder %s99, %s100
      %p111 = scmp.eq.s32.totalorder %s23, 0
      %p112 = por %p110, %p111
      %p113 = scmp.ne.s32.totalorder %s99, %s100
      %p114 = scmp.eq.s32.totalorder %s24, 1
      %p115 = por %p113, %p114
      %p117 = scmp.ne.s32.totalorder %s100, %s116
      %p118 = scmp.eq.s32.totalorder %s24, 0
      %p119 = por %p117, %p118
      %s120 = ssub.s32 %s18, %s25
      %p121 = scmp.eq.s32.totalorder %s120, 0
      %s123 = sadd.s32 %s122, 1
      %s124 = scalar_select %p121, %s122, %s123
      %p127 = pneg %p121
      %p128 = scmp.eq.s32.totalorder %s18, 1
      %p129 = por %p127, %p128
      %p130 = scmp.ne.s32.totalorder %s122, %s125
      %p131 = scmp.eq.s32.totalorder %s18, 0
      %p132 = por %p130, %p131
      %p133 = scmp.ne.s32.totalorder %s122, %s125
      %p134 = scmp.eq.s32.totalorder %s23, 1
      %p135 = por %p133, %p134
      %p136 = scmp.ne.s32.totalorder %s125, %s126
      %p137 = scmp.eq.s32.totalorder %s23, 0
      %p138 = por %p136, %p137
      %p139 = scmp.ne.s32.totalorder %s125, %s126
      %p140 = scmp.eq.s32.totalorder %s24, 1
      %p141 = por %p139, %p140
      %p143 = scmp.ne.s32.totalorder %s126, %s142
      %p144 = scmp.eq.s32.totalorder %s24, 0
      %p145 = por %p143, %p144
      %s146 = ssub.s32 %s18, %s25
      %p147 = scmp.eq.s32.totalorder %s146, 0
      %s149 = sadd.s32 %s148, 1
      %s150 = scalar_select %p147, %s148, %s149
      %p153 = pneg %p147
      %p154 = scmp.eq.s32.totalorder %s18, 1
      %p155 = por %p153, %p154
      %p156 = scmp.ne.s32.totalorder %s148, %s151
      %p157 = scmp.eq.s32.totalorder %s18, 0
      %p158 = por %p156, %p157
      %p159 = scmp.ne.s32.totalorder %s148, %s151
      %p160 = scmp.eq.s32.totalorder %s23, 1
      %p161 = por %p159, %p160
      %p162 = scmp.ne.s32.totalorder %s151, %s152
      %p163 = scmp.eq.s32.totalorder %s23, 0
      %p164 = por %p162, %p163
      %p165 = scmp.ne.s32.totalorder %s151, %s152
      %p166 = scmp.eq.s32.totalorder %s24, 1
      %p167 = por %p165, %p166
      %p169 = scmp.ne.s32.totalorder %s152, %s168
      %p170 = scmp.eq.s32.totalorder %s24, 0
      %p171 = por %p169, %p170
      %p172 = scmp.le.s32.totalorder 1, %s18
      %p173 = scmp.lt.s32.totalorder %s18, 3
      %p174 = pnand %p172, %p173
      %p175 = pneg %p174
      // Predicated region
      $region9: #{tpu_custom_call.1} parent=5 // pred_check
        _
      $region10: #{tpu_custom_call.1} parent=5 // pred_check_branch
        %177 = sbr.rel (%p174) target = $region12
      $region11: #{tpu_custom_call.1} parent=5 // pred_region
        %s178 = ssub.s32 %s18, 1
        // Predicated region
        $region13: #{tpu_custom_call.1} parent=11 // pred_check
          %p179 = pneg %p65
        $region14: #{tpu_custom_call.1} parent=11 // pred_check_branch
          %181 = sbr.rel (%p179) target = $region16
        $region15: #{tpu_custom_call.1} parent=11 // pred_region
          _
        $region16: #{tpu_custom_call.1} parent=11 // pred_fallthru
          _
        // Predicated region
        $region17: #{tpu_custom_call.1} parent=11 // pred_check
          %p182 = pneg %p86
        $region18: #{tpu_custom_call.1} parent=11 // pred_check_branch
          %184 = sbr.rel (%p182) target = $region20
        $region19: #{tpu_custom_call.1} parent=11 // pred_region
          _
        $region20: #{tpu_custom_call.1} parent=11 // pred_fallthru
          _
      $region12: #{tpu_custom_call.1} parent=5 // pred_fallthru
        _
      %p185 = scmp.lt.s32.totalorder %s18, 2
      // Predicated region
      $region21: #{tpu_custom_call.1} parent=5 // pred_check
        %p186 = pneg %p185
      $region22: #{tpu_custom_call.1} parent=5 // pred_check_branch
        %188 = sbr.rel (%p186) target = $region24
      $region23: #{tpu_custom_call.1} parent=5 // pred_region
        // Predicated region
        $region25: #{tpu_custom_call.1} parent=23 // pred_check
          %p189 = pneg %p38
        $region26: #{tpu_custom_call.1} parent=23 // pred_check_branch
          %191 = sbr.rel (%p189) target = $region28
        $region27: #{tpu_custom_call.1} parent=23 // pred_region
          %s192 = smul.u32 2, %s18
          %p193 = scmp.lt.s32.totalorder %s192, 3
          %s194 = scalar_select %p193, %s192, 3
          %s195 = smul.addr %s194, 8
          %s196 = scalar_lea.vmem %s0, %s195
          %s197 = smul.u32 2, %s18
        $region28: #{tpu_custom_call.1} parent=23 // pred_fallthru
          _
      $region24: #{tpu_custom_call.1} parent=5 // pred_fallthru
        _
      %p198 = scmp.le.s32.totalorder 1, %s18
      %p199 = scmp.lt.s32.totalorder %s18, 3
      %p200 = pnand %p198, %p199
      %p201 = pneg %p200
      // Predicated region
      $region29: #{tpu_custom_call.1} parent=5 // pred_check
        _
      $region30: #{tpu_custom_call.1} parent=5 // pred_check_branch
        %203 = sbr.rel (%p200) target = $region32
      $region31: #{tpu_custom_call.1} parent=5 // pred_region
        %s204 = ssub.s32 %s18, 1
        %s205 = smul.u32 2, %s23
        %p206 = scmp.lt.s32.totalorder %s205, 3
        %s207 = scalar_select %p206, %s205, 3
        %s208 = smul.addr %s207, 8
        %s209 = scalar_lea.vmem %s0, %s208
        %p210 = pneg %p44
        %p211 = pneg %p41
        %p212 = pneg %p65
        %p213 = pneg %p62
        %p214 = pneg %p86
        %p215 = pneg %p83
        %p216 = pneg %p112
        %p217 = pneg %p109
        %s218 = sand.u32 %s99, 1
        %s219 = scalar_lea.sflag [#allocation3], %s218
        %s220 = sand.u32 %s99, 1
        %s221 = smul.addr %s220, 16
        %s222 = scalar_lea.vmem [#allocation2], %s221
        %p223 = pneg %p138
        %p224 = pneg %p135
        %s225 = sand.u32 %s23, 1
        %s226 = scalar_lea.sflag [#allocation5], %s225
        %s227 = sand.u32 %s125, 1
        %s228 = smul.addr %s227, 16
        %s229 = scalar_lea.vmem [#allocation4], %s228
        %p230 = pneg %p164
        %p231 = pneg %p161
        %s232 = sand.u32 %s23, 1
        %s233 = scalar_lea.sflag [#allocation5], %s232
        %s234 = sand.u32 %s151, 1
        %s235 = smul.addr %s234, 16
        %s236 = scalar_lea.vmem [#allocation6], %s235
        %s237 = smul.u32 2, %s23
        %p238 = scmp.lt.s32.totalorder %s237, 3
        %s239 = scalar_select %p238, %s237, 3
        %s240 = smul.addr %s239, 8
        %s241 = scalar_lea.vmem %s0, %s240
        %s242 = smul.u32 2, %s23
        %s243 = smul.u32 2, %s23
        %s244 = smul.u32 2, %s23
        %s245 = smul.u32 2, %s23
        %v247 = vld [vmem:[%s241] sm:$0xff]
        %v248 = vld [vmem:[%s241 + $0x8] sm:$0xff]
        %v249 = vpack.c.bf16 %v248, %v247
        %v250 = vld [vmem:[%s1] sm:$0xf]
        %v251 = vld [vmem:[%s1 + $0x4] sm:$0xf]
        %v252 = vld [vmem:[%s2] sm:$0x1]
        %v254 = vlaneseq
        %v255 = vshrl.u32 %v254, 7
        %v256 = vsub.s32 0, %v255
        %v257 = vrot.slane %v252, %v256
        %v261 = vunpack.c.l.b16 %v250
        %v262 = vunpack.c.l.b16 %v251
        %v263 = vpack.c.b16 %v262, %v261
        %vm265 = vcmask 130048
        %v267 = vsel %vm265, %v249, 0
        %269 = vmatprep.subr.bf16.mxu0 0
        %270 = vmatpush1.bf16.msra.mxu0 %v263
        %271 = vmatprep.subr.bf16.mxu0 0
        %272 = vmatpush1.bf16.msra.mxu0 0
        %273 = vmatprep.subr.bf16.mxu0 0
        %274 = vmatpush1.bf16.msra.mxu0 0
        %275 = vmatprep.subr.bf16.mxu0 0
        %276 = vmatpush1.bf16.msra.mxu0 0
        %277 = vmatprep.subr.bf16.mxu0 0
        %278 = vmatpush1.bf16.msra.mxu0 0
        %279 = vmatprep.subr.bf16.mxu0 0
        %280 = vmatpush1.bf16.msra.mxu0 0
        %281 = vmatprep.subr.bf16.mxu0 0
        %282 = vmatpush1.bf16.msra.mxu0 0
        %283 = vmatprep.subr.bf16.mxu0 0
        %284 = vmatpush1.bf16.msra.mxu0 0
        %285 = vmatprep.subr.bf16.mxu0 0
        %286 = vmatpush1.bf16.msra.mxu0 0
        %287 = vmatprep.subr.bf16.mxu0 0
        %288 = vmatpush1.bf16.msra.mxu0 0
        %289 = vmatprep.subr.bf16.mxu0 0
        %290 = vmatpush1.bf16.msra.mxu0 0
        %291 = vmatprep.subr.bf16.mxu0 0
        %292 = vmatpush1.bf16.msra.mxu0 0
        %293 = vmatprep.subr.bf16.mxu0 0
        %294 = vmatpush1.bf16.msra.mxu0 0
        %295 = vmatprep.subr.bf16.mxu0 0
        %296 = vmatpush1.bf16.msra.mxu0 0
        %297 = vmatprep.subr.bf16.mxu0 0
        %298 = vmatpush1.bf16.msra.mxu0 0
        %299 = vmatprep.subr.bf16.mxu0 0
        %300 = vmatpush1.bf16.msra.mxu0 0
        %301 = vmatprep.mubr.bf16.mxu0 0
        %302 = vmatmul.mubr.bf16.gmra.mrb[0].mxu0 %v267
        %v303 = vpop.f32.mrb[0].mxu0
        %v304 = vadd.f32 %v257, %v303
        %v305 = vpop.f32.mrb[0].mxu0
        %v306 = vpop.f32.mrb[0].mxu0
        %v307 = vadd.f32 %v257, %v306
        %v308 = vpop.f32.mrb[0].mxu0
        %309 = vdwg.mxu0
        %s310 = scalar_lea.vmem %s1, 8
        %v311 = vld [vmem:[%s310] sm:$0xf]
        %v312 = vld [vmem:[%s310 + $0x4] sm:$0xf]
        %s313 = scalar_lea.vmem %s2, 1
        %v314 = vld [vmem:[%s313] sm:$0x1]
        %v316 = vlaneseq
        %v317 = vshrl.u32 %v316, 7
        %v318 = vsub.s32 0, %v317
        %v319 = vrot.slane %v314, %v318
        %v323 = vunpack.c.l.b16 %v311
        %v324 = vunpack.c.l.b16 %v312
        %v325 = vpack.c.b16 %v324, %v323
        %327 = vmatprep.subr.bf16.mxu0 0
        %328 = vmatpush1.bf16.msra.mxu0 %v325
        %329 = vmatprep.subr.bf16.mxu0 0
        %330 = vmatpush1.bf16.msra.mxu0 0
        %331 = vmatprep.subr.bf16.mxu0 0
        %332 = vmatpush1.bf16.msra.mxu0 0
        %333 = vmatprep.subr.bf16.mxu0 0
        %334 = vmatpush1.bf16.msra.mxu0 0
        %335 = vmatprep.subr.bf16.mxu0 0
        %336 = vmatpush1.bf16.msra.mxu0 0
        %337 = vmatprep.subr.bf16.mxu0 0
        %338 = vmatpush1.bf16.msra.mxu0 0
        %339 = vmatprep.subr.bf16.mxu0 0
        %340 = vmatpush1.bf16.msra.mxu0 0
        %341 = vmatprep.subr.bf16.mxu0 0
        %342 = vmatpush1.bf16.msra.mxu0 0
        %343 = vmatprep.subr.bf16.mxu0 0
        %344 = vmatpush1.bf16.msra.mxu0 0
        %345 = vmatprep.subr.bf16.mxu0 0
        %346 = vmatpush1.bf16.msra.mxu0 0
        %347 = vmatprep.subr.bf16.mxu0 0
        %348 = vmatpush1.bf16.msra.mxu0 0
        %349 = vmatprep.subr.bf16.mxu0 0
        %350 = vmatpush1.bf16.msra.mxu0 0
        %351 = vmatprep.subr.bf16.mxu0 0
        %352 = vmatpush1.bf16.msra.mxu0 0
        %353 = vmatprep.subr.bf16.mxu0 0
        %354 = vmatpush1.bf16.msra.mxu0 0
        %355 = vmatprep.subr.bf16.mxu0 0
        %356 = vmatpush1.bf16.msra.mxu0 0
        %357 = vmatprep.subr.bf16.mxu0 0
        %358 = vmatpush1.bf16.msra.mxu0 0
        %359 = vmatprep.mubr.bf16.mxu0 0
        %360 = vmatmul.mubr.bf16.gmra.mrb[0].mxu0 %v267
        %v361 = vpop.f32.mrb[0].mxu0
        %v362 = vadd.f32 %v319, %v361
        %v363 = vpop.f32.mrb[0].mxu0
        %v364 = vpop.f32.mrb[0].mxu0
        %v365 = vadd.f32 %v319, %v364
        %v366 = vpop.f32.mrb[0].mxu0
        %367 = vdwg.mxu0
        %s368 = scalar_lea.vmem %s1, 16
        %v369 = vld [vmem:[%s368] sm:$0xf]
        %v370 = vld [vmem:[%s368 + $0x4] sm:$0xf]
        %s371 = scalar_lea.vmem %s2, 2
        %v372 = vld [vmem:[%s371] sm:$0x1]
        %v374 = vlaneseq
        %v375 = vshrl.u32 %v374, 7
        %v376 = vsub.s32 0, %v375
        %v377 = vrot.slane %v372, %v376
        %v381 = vunpack.c.l.b16 %v369
        %v382 = vunpack.c.l.b16 %v370
        %v383 = vpack.c.b16 %v382, %v381
        %385 = vmatprep.subr.bf16.mxu0 0
        %386 = vmatpush1.bf16.msra.mxu0 %v383
        %387 = vmatprep.subr.bf16.mxu0 0
        %388 = vmatpush1.bf16.msra.mxu0 0
        %389 = vmatprep.subr.bf16.mxu0 0
        %390 = vmatpush1.bf16.msra.mxu0 0
        %391 = vmatprep.subr.bf16.mxu0 0
        %392 = vmatpush1.bf16.msra.mxu0 0
        %393 = vmatprep.subr.bf16.mxu0 0
        %394 = vmatpush1.bf16.msra.mxu0 0
        %395 = vmatprep.subr.bf16.mxu0 0
        %396 = vmatpush1.bf16.msra.mxu0 0
        %397 = vmatprep.subr.bf16.mxu0 0
        %398 = vmatpush1.bf16.msra.mxu0 0
        %399 = vmatprep.subr.bf16.mxu0 0
        %400 = vmatpush1.bf16.msra.mxu0 0
        %401 = vmatprep.subr.bf16.mxu0 0
        %402 = vmatpush1.bf16.msra.mxu0 0
        %403 = vmatprep.subr.bf16.mxu0 0
        %404 = vmatpush1.bf16.msra.mxu0 0
        %405 = vmatprep.subr.bf16.mxu0 0
        %406 = vmatpush1.bf16.msra.mxu0 0
        %407 = vmatprep.subr.bf16.mxu0 0
        %408 = vmatpush1.bf16.msra.mxu0 0
        %409 = vmatprep.subr.bf16.mxu0 0
        %410 = vmatpush1.bf16.msra.mxu0 0
        %411 = vmatprep.subr.bf16.mxu0 0
        %412 = vmatpush1.bf16.msra.mxu0 0
        %413 = vmatprep.subr.bf16.mxu0 0
        %414 = vmatpush1.bf16.msra.mxu0 0
        %415 = vmatprep.subr.bf16.mxu0 0
        %416 = vmatpush1.bf16.msra.mxu0 0
        %417 = vmatprep.mubr.bf16.mxu0 0
        %418 = vmatmul.mubr.bf16.gmra.mrb[0].mxu0 %v267
        %v419 = vpop.f32.mrb[0].mxu0
        %v420 = vadd.f32 %v377, %v419
        %v421 = vpop.f32.mrb[0].mxu0
        %v422 = vpop.f32.mrb[0].mxu0
        %v423 = vadd.f32 %v377, %v422
        %v424 = vpop.f32.mrb[0].mxu0
        %425 = vdwg.mxu0
        %v426 = vtanh.pop %v304
        %v427 = vtanh.pop %v307
        %v428 = vsub.f32 0.0, %v362
        %v429 = vsub.f32 0.0, %v365
        %v430 = vmul.f32 %v428, 1.442695
        %v431 = vpow.pop %v430
        %v432 = vmul.f32 %v429, 1.442695
        %v433 = vpow.pop %v432
        %v434 = vadd.f32 %v431, 1.0
        %v435 = vadd.f32 %v433, 1.0
        %v436 = vrcp.pop %v434
        %v437 = vmul.f32 1.0, %v436
        %v438 = vrcp.pop %v435
        %v439 = vmul.f32 1.0, %v438
        %v440 = vmul.f32 %v437, %v426
        %v441 = vmul.f32 %v439, %v427
        %vm442 = vcmask 261120
        %443 = vst.msk [vmem:[%s222] sm:$0xff] %vm442, %v440
        %444 = vst.msk [vmem:[%s222 + $0x8] sm:$0xff] %vm442, %v441
        %v445 = vsub.f32 1.0, %v437
        %v446 = vsub.f32 1.0, %v439
        %447 = vst.msk [vmem:[%s229] sm:$0xff] %vm442, %v445
        %448 = vst.msk [vmem:[%s229 + $0x8] sm:$0xff] %vm442, %v446
        %v449 = vsub.f32 0.0, %v420
        %v450 = vsub.f32 0.0, %v423
        %v451 = vmul.f32 %v449, 1.442695
        %v452 = vpow.pop %v451
        %v453 = vmul.f32 %v450, 1.442695
        %v454 = vpow.pop %v453
        %v455 = vadd.f32 %v452, 1.0
        %v456 = vadd.f32 %v454, 1.0
        %v457 = vrcp.pop %v455
        %v458 = vmul.f32 1.0, %v457
        %v459 = vrcp.pop %v456
        %v460 = vmul.f32 1.0, %v459
        %461 = vst.msk [vmem:[%s236] sm:$0xff] %vm442, %v458
        %462 = vst.msk [vmem:[%s236 + $0x8] sm:$0xff] %vm442, %v460
        %s463 = sand.u32 %s99, 1
        %s464 = scalar_lea.sflag [#allocation3], %s463
        %s465 = sand.u32 %s99, 1
        %s466 = smul.addr %s465, 16
        %s467 = scalar_lea.vmem [#allocation2], %s466
        %s468 = sand.u32 %s23, 1
        %s469 = scalar_lea.sflag [#allocation5], %s468
        %s470 = sand.u32 %s125, 1
        %s471 = smul.addr %s470, 16
        %s472 = scalar_lea.vmem [#allocation4], %s471
        %s473 = sand.u32 %s23, 1
        %s474 = scalar_lea.sflag [#allocation5], %s473
        %s475 = sand.u32 %s151, 1
        %s476 = smul.addr %s475, 16
        %s477 = scalar_lea.vmem [#allocation6], %s476
        // Predicated region
        $region33: #{tpu_custom_call.1} parent=31 // pred_check
          %p478 = pneg %p109
        $region34: #{tpu_custom_call.1} parent=31 // pred_check_branch
          %480 = sbr.rel (%p478) target = $region36
        $region35: #{tpu_custom_call.1} parent=31 // pred_region
          %s481 = smul.u32 2, %s23
          %s483 = ssub.s32 256, 256
          %484 = vsyncadd %s464, %s483
          %s485 = smul.addr %s481, 128
          %s486 = scalar_lea.hbm %s3, %s485
          %s487 = sshll.u32 %s467, 4
          %s488 = int_to_ptr.vmem [resolvable:$true] %s487
          %493 = dma.vmem_to_hbm [thread:$0]  %s488, 256, %s486, %s464, 128, 128, 8
        $region36: #{tpu_custom_call.1} parent=31 // pred_fallthru
          _
        // Predicated region
        $region37: #{tpu_custom_call.1} parent=31 // pred_check
          %p494 = pneg %p135
        $region38: #{tpu_custom_call.1} parent=31 // pred_check_branch
          %496 = sbr.rel (%p494) target = $region40
        $region39: #{tpu_custom_call.1} parent=31 // pred_region
          %s497 = smul.u32 2, %s23
          %s499 = ssub.s32 256, 256
          %500 = vsyncadd %s469, %s499
          %s501 = smul.addr %s497, 128
          %s502 = scalar_lea.hbm %s4, %s501
          %s503 = sshll.u32 %s472, 4
          %s504 = int_to_ptr.vmem [resolvable:$true] %s503
          %509 = dma.vmem_to_hbm [thread:$0]  %s504, 256, %s502, %s469, 128, 128, 8
        $region40: #{tpu_custom_call.1} parent=31 // pred_fallthru
          _
        // Predicated region
        $region41: #{tpu_custom_call.1} parent=31 // pred_check
          %p510 = pneg %p161
        $region42: #{tpu_custom_call.1} parent=31 // pred_check_branch
          %512 = sbr.rel (%p510) target = $region44
        $region43: #{tpu_custom_call.1} parent=31 // pred_region
          %s513 = smul.u32 2, %s23
          %s515 = ssub.s32 256, 256
          %516 = vsyncadd %s474, %s515
          %s517 = smul.addr %s513, 128
          %s518 = scalar_lea.hbm %s5, %s517
          %s519 = sshll.u32 %s477, 4
          %s520 = int_to_ptr.vmem [resolvable:$true] %s519
          %525 = dma.vmem_to_hbm [thread:$0]  %s520, 256, %s518, %s474, 128, 128, 8
        $region44: #{tpu_custom_call.1} parent=31 // pred_fallthru
          _
      $region32: #{tpu_custom_call.1} parent=5 // pred_fallthru
        _
      %p526 = scmp.le.s32.totalorder 2, %s18
      // Predicated region
      $region45: #{tpu_custom_call.1} parent=5 // pred_check
        %p527 = pneg %p526
      $region46: #{tpu_custom_call.1} parent=5 // pred_check_branch
        %529 = sbr.rel (%p527) target = $region48
      $region47: #{tpu_custom_call.1} parent=5 // pred_region
        %s530 = ssub.s32 %s18, 2
        // Predicated region
        $region49: #{tpu_custom_call.1} parent=47 // pred_check
          %p531 = pneg %p115
        $region50: #{tpu_custom_call.1} parent=47 // pred_check_branch
          %533 = sbr.rel (%p531) target = $region52
        $region51: #{tpu_custom_call.1} parent=47 // pred_region
          %s534 = sand.u32 %s100, 1
          %s535 = scalar_lea.sflag [#allocation3], %s534
          %s536 = sand.u32 %s100, 1
          %s537 = smul.addr %s536, 16
          %s538 = scalar_lea.vmem [#allocation2], %s537
          %539 = dma.done %s535, 256
        $region52: #{tpu_custom_call.1} parent=47 // pred_fallthru
          _
        // Predicated region
        $region53: #{tpu_custom_call.1} parent=47 // pred_check
          %p540 = pneg %p141
        $region54: #{tpu_custom_call.1} parent=47 // pred_check_branch
          %542 = sbr.rel (%p540) target = $region56
        $region55: #{tpu_custom_call.1} parent=47 // pred_region
          %s543 = sand.u32 %s24, 1
          %s544 = scalar_lea.sflag [#allocation5], %s543
          %s545 = sand.u32 %s126, 1
          %s546 = smul.addr %s545, 16
          %s547 = scalar_lea.vmem [#allocation4], %s546
          %548 = dma.done %s544, 256
        $region56: #{tpu_custom_call.1} parent=47 // pred_fallthru
          _
        // Predicated region
        $region57: #{tpu_custom_call.1} parent=47 // pred_check
          %p549 = pneg %p167
        $region58: #{tpu_custom_call.1} parent=47 // pred_check_branch
          %551 = sbr.rel (%p549) target = $region60
        $region59: #{tpu_custom_call.1} parent=47 // pred_region
          %s552 = sand.u32 %s24, 1
          %s553 = scalar_lea.sflag [#allocation5], %s552
          %s554 = sand.u32 %s152, 1
          %s555 = smul.addr %s554, 16
          %s556 = scalar_lea.vmem [#allocation6], %s555
          %557 = dma.done %s553, 256
        $region60: #{tpu_custom_call.1} parent=47 // pred_fallthru
          _
      $region48: #{tpu_custom_call.1} parent=5 // pred_fallthru
        _
    $region6: #{tpu_custom_call.1} parent=1 // loop_footer
      %s22 = sadd.s32 1, %s18
    $region7: #{tpu_custom_call.1} parent=1 // loop_footer_branch
      %17 = sbr.rel target = $region3
    $region8: #{tpu_custom_call.1} parent=1 // loop_exit
      _
    %558 = vsyncpa [#allocation3], 1
    %s559 = scalar_lea.sflag [#allocation3], 1
    %560 = vsyncpa %s559, 1
    %561 = vsyncpa [#allocation5], 1
    %s562 = scalar_lea.sflag [#allocation5], 1
    %563 = vsyncpa %s562, 1

</llo_original>
